<compile_context>
chip_gen: v5e
topology: v5e:2x2
jax: 0.10.0
libtpu: 0.0.40
codegen_flags: <defaults>
</compile_context>

<pallas_src>
import math

import jax
import jax.numpy as jnp
from jax.experimental import pallas as pl
from jax.experimental.pallas import tpu as pltpu

_LANE = 128


def _relativeloss_kernel(za_ref, zb_ref, gt_ref, out_ref):
    # Compute in f32: exp/log1p in bf16 lose precision, and the extra VALU/EUP
    # casts are free under the HBM roofline for this bandwidth-bound kernel.
    za = za_ref[...].astype(jnp.float32)
    zb = zb_ref[...].astype(jnp.float32)
    gt = gt_ref[...].astype(jnp.float32)

    diff = za - zb
    mask = jnp.abs(gt)
    # Stable softplus of x = -gt * diff (avoids exp overflow for large |diff|).
    x = -gt * diff
    log_term = jnp.maximum(x, 0.0) + jnp.log1p(jnp.exp(-jnp.abs(x)))
    out = mask * log_term + (1.0 - mask) * diff * diff
    out_ref[...] = out.astype(out_ref.dtype)


def _round_up(x, m):
    return ((x + m - 1) // m) * m


def _choose_block_rows(rows, itemsize):
    """Pick block rows for a (rows, 128) slab.

    Scales with the input (no small-input cliff), caps at ~2 MiB per array per
    pipeline buffer, respects dtype-dependent minimum sublane tiling, and
    guarantees >=2 grid steps for inputs big enough to split across v7x's two
    TensorCores.
    """
    sub_min = max(8, 32 // itemsize)            # (8,128) f32, (16,128) bf16, (32,128) i8/fp8
    tr_max = (2 << 20) // (_LANE * itemsize)     # ~2 MiB per block per array
    tr = min(tr_max, _round_up(rows, sub_min))
    # If a single block would cover everything but the input is large enough to
    # be worth sharing across two TensorCores (>=128 KiB per TC), split in two.
    if pl.cdiv(rows, tr) < 2 and rows * _LANE * itemsize >= (256 << 10):
        tr = max(sub_min, _round_up(pl.cdiv(rows, 2), sub_min))
    return tr


def relativeloss(zA, zB, gt):
    """Elementwise relative loss; returns a tensor with the same shape as inputs."""
    assert zA.shape == zB.shape == gt.shape
    orig_shape = zA.shape
    dtype = zA.dtype
    total = math.prod(orig_shape) if orig_shape else 1

    rows = pl.cdiv(total, _LANE)
    padded_total = rows * _LANE
    needs_pad = padded_total != total

    def prep(x):
        flat = x.reshape((total,))
        if needs_pad:
            # <=127 extra elements; benign (mask=0, diff=0 -> padded outputs are 0).
            flat = jnp.pad(flat, (0, padded_total - total))
        return flat.reshape((rows, _LANE))

    itemsize = jnp.dtype(dtype).itemsize
    tr = _choose_block_rows(rows, itemsize)
    num_blocks = pl.cdiv(rows, tr)  # trailing partial block is masked by Pallas

    spec = pl.BlockSpec((tr, _LANE), lambda i: (i, 0))

    out2 = pl.pallas_call(
        _relativeloss_kernel,
        out_shape=jax.ShapeDtypeStruct((rows, _LANE), dtype),
        grid=(num_blocks,),
        in_specs=[spec, spec, spec],
        out_specs=spec,
        compiler_params=pltpu.CompilerParams(
            dimension_semantics=("parallel",),
            # 4 arrays x 2 buffers x ~2 MiB = 16 MiB + compiler scratch; set the
            # scoped limit explicitly so v5e's 16 MiB default doesn't OOM.
            vmem_limit_bytes=32 << 20,
        ),
    )(prep(zA), prep(zB), prep(gt))

    # TODO(synk): if callers always reduce this loss to a scalar, fuse the
    # reduction in-kernel (per-block partial sums + pl.when finalize) to drop
    # the full-size output writeback (~1/4 of HBM bytes). The PyTorch module
    # returns the elementwise tensor, so we keep those semantics here.
    out_flat = out2.reshape((padded_total,))
    if needs_pad:
        out_flat = out_flat[:total]
    return out_flat.reshape(orig_shape)


def _reference(zA, zB, gt):
    mask = jnp.abs(gt)
    diff = zA - zB
    x = -gt * diff
    log_term = jnp.maximum(x, 0.0) + jnp.log1p(jnp.exp(-jnp.abs(x)))
    return mask * log_term + (1.0 - mask) * diff * diff


if __name__ == "__main__":
    key = jax.random.PRNGKey(0)
    k1, k2, k3 = jax.random.split(key, 3)

    # Small NCHW shapes consistent with a depth-prediction setting.
    shape = (2, 4, 16, 16)
    zA = jax.random.normal(k1, shape, dtype=jnp.float32)
    zB = jax.random.normal(k2, shape, dtype=jnp.float32)
    # gt is an ordinal relation label in {-1, 0, +1}
    gt = jax.random.randint(k3, shape, -1, 2).astype(jnp.float32)

    out = relativeloss(zA, zB, gt)
    jax.block_until_ready(out)

    ref = _reference(zA, zB, gt)
    assert out.shape == shape
    assert jnp.allclose(out, ref, atol=1e-5, rtol=1e-5), "mismatch vs reference"

    # Exercise a non-128-multiple size (partial trailing block + tiny pad path).
    shape2 = (3, 5, 7)
    a2 = jax.random.normal(k1, shape2, dtype=jnp.float32)
    b2 = jax.random.normal(k2, shape2, dtype=jnp.float32)
    g2 = jax.random.randint(k3, shape2, -1, 2).astype(jnp.float32)
    out2 = relativeloss(a2, b2, g2)
    jax.block_until_ready(out2)
    assert jnp.allclose(out2, _reference(a2, b2, g2), atol=1e-5, rtol=1e-5)

    print("KERNEL_OK")
</pallas_src>

<mosaic_0001>
module attributes {stable_mosaic.version = 11 : i64} {
  func.func @_relativeloss_kernel(%arg0: i32, %arg1: memref<16x128xf32, #tpu.memory_space<vmem>>, %arg2: memref<16x128xf32, #tpu.memory_space<vmem>>, %arg3: memref<16x128xf32, #tpu.memory_space<vmem>>, %arg4: memref<16x128xf32, #tpu.memory_space<vmem>>) attributes {dimension_semantics = [#tpu.dimension_semantics<parallel>], iteration_bounds = array<i64: 1>, scalar_prefetch = 0 : i64, scratch_operands = 0 : i64, tpu.core_type = #tpu.core_type<tc>, window_params = [{transform_indices = @transform_0, window_bounds = array<i64: 16, 128>}, {transform_indices = @transform_1, window_bounds = array<i64: 16, 128>}, {transform_indices = @transform_2, window_bounds = array<i64: 16, 128>}, {transform_indices = @transform_3, window_bounds = array<i64: 16, 128>}]} {
    %c0 = arith.constant 0 : index
    %c0_0 = arith.constant 0 : index
    %0 = vector.load %arg1[%c0, %c0_0] : memref<16x128xf32, #tpu.memory_space<vmem>>, vector<16x128xf32>
    %c0_1 = arith.constant 0 : index
    %c0_2 = arith.constant 0 : index
    %1 = vector.load %arg2[%c0_1, %c0_2] : memref<16x128xf32, #tpu.memory_space<vmem>>, vector<16x128xf32>
    %c0_3 = arith.constant 0 : index
    %c0_4 = arith.constant 0 : index
    %2 = vector.load %arg3[%c0_3, %c0_4] : memref<16x128xf32, #tpu.memory_space<vmem>>, vector<16x128xf32>
    %3 = arith.subf %0, %1 : vector<16x128xf32>
    %4 = math.absf %2 : vector<16x128xf32>
    %cst = arith.constant 0.000000e+00 : f32
    %5 = vector.broadcast %cst : f32 to vector<16x128xf32>
    %6 = arith.subf %5, %2 : vector<16x128xf32>
    %7 = arith.mulf %6, %3 : vector<16x128xf32>
    %cst_5 = arith.constant 0.000000e+00 : f32
    %8 = vector.broadcast %cst_5 : f32 to vector<16x128xf32>
    %9 = arith.maximumf %7, %8 : vector<16x128xf32>
    %10 = math.absf %7 : vector<16x128xf32>
    %cst_6 = arith.constant 0.000000e+00 : f32
    %11 = vector.broadcast %cst_6 : f32 to vector<16x128xf32>
    %12 = arith.subf %11, %10 : vector<16x128xf32>
    %13 = math.exp %12 : vector<16x128xf32>
    %14 = math.log1p %13 : vector<16x128xf32>
    %15 = arith.addf %9, %14 : vector<16x128xf32>
    %16 = arith.mulf %4, %15 : vector<16x128xf32>
    %cst_7 = arith.constant 1.000000e+00 : f32
    %17 = vector.broadcast %cst_7 : f32 to vector<16x128xf32>
    %18 = arith.subf %17, %4 : vector<16x128xf32>
    %19 = arith.mulf %18, %3 : vector<16x128xf32>
    %20 = arith.mulf %19, %3 : vector<16x128xf32>
    %21 = arith.addf %16, %20 : vector<16x128xf32>
    %c0_8 = arith.constant 0 : index
    %c0_9 = arith.constant 0 : index
    %22 = vector.load %arg4[%c0_8, %c0_9] : memref<16x128xf32, #tpu.memory_space<vmem>>, vector<16x128xf32>
    tpu.vector_store %arg4[%c0_8, %c0_9], %21 {strides = array<i32>} : memref<16x128xf32, #tpu.memory_space<vmem>>, vector<16x128xf32>,
    return
  }
  func.func @transform_0(%arg0: i32) -> (i32, i32) {
    %c0_i32 = arith.constant 0 : i32
    %c0_i32_0 = arith.constant 0 : i32
    return %arg0, %c0_i32 : i32, i32
  }
  func.func @transform_1(%arg0: i32) -> (i32, i32) {
    %c0_i32 = arith.constant 0 : i32
    %c0_i32_0 = arith.constant 0 : i32
    return %arg0, %c0_i32 : i32, i32
  }
  func.func @transform_2(%arg0: i32) -> (i32, i32) {
    %c0_i32 = arith.constant 0 : i32
    %c0_i32_0 = arith.constant 0 : i32
    return %arg0, %c0_i32 : i32, i32
  }
  func.func @transform_3(%arg0: i32) -> (i32, i32) {
    %c0_i32 = arith.constant 0 : i32
    %c0_i32_0 = arith.constant 0 : i32
    return %arg0, %c0_i32 : i32, i32
  }
}

</mosaic_0001>

<llo_original>
// kernel: tpu_custom_call.1
$region0: #{tpu_custom_call.1}
  #allocation0 [shape = 'u32[]', space=smem, size = 0x4, offset = 0x4, fixed_abs, tag = 'smem constant byte address 0x4 - core index']
  #allocation1 [shape = 'u32[72,128]{1,0:T(1,128)}', space=vmem, size = 0x9000, scoped, tag = 'internal scratch']
  %s0 = inlined_call_operand.hbm [shape: f32[16,128], index: 0, kind: input, shape index: {}]
  %s1 = inlined_call_operand.hbm [shape: f32[16,128], index: 1, kind: input, shape index: {}]
  %s2 = inlined_call_operand.hbm [shape: f32[16,128], index: 2, kind: input, shape index: {}]
  %s3 = inlined_call_operand.hbm [shape: f32[16,128], index: 3, kind: output, shape index: {}]
  %s4 = sld [smem:[#allocation0]]
  $region34: #{tpu_custom_call.1} parent=0
    _
  %s6 = ssub.s32 1, %s4
  %s7 = scalar_select 0, %s6, %s4
  $region1: #{tpu_custom_call.1} parent=0
    #allocation2 [shape = 'u8[8192]{0}', space=vmem, size = 0x2000, scoped, tag = 'input window, operand 0, single buffered']
    #allocation3 [shape = 's32[1]{0}', space=sflag, size = 0x4, scoped, tag = 'scoped memory for tpu_custom_call.1']
    #allocation4 [shape = 's32[1]{0}', space=sflag, size = 0x4, scoped, tag = 'scoped memory for tpu_custom_call.1']
    #allocation5 [shape = 'u8[8192]{0}', space=vmem, size = 0x2000, scoped, tag = 'input window, operand 1, single buffered']
    #allocation6 [shape = 's32[1]{0}', space=sflag, size = 0x4, scoped, tag = 'scoped memory for tpu_custom_call.1']
    #allocation7 [shape = 'u8[8192]{0}', space=vmem, size = 0x2000, scoped, tag = 'input window, operand 2, single buffered']
    #allocation8 [shape = 'u8[8192]{0}', space=vmem, size = 0x2000, scoped, tag = 'output window, operand 0, single buffered']
    %8 = vsyncpa [#allocation3], 0
    %9 = vsyncpa [#allocation6], 0
    %10 = vsyncpa [#allocation4], 0
    // Predicated region
    $region2: #{tpu_custom_call.1} parent=1 // pred_check
      _
    $region3: #{tpu_custom_call.1} parent=1 // pred_check_branch
      %12 = sbr.rel (0) target = $region5
    $region4: #{tpu_custom_call.1} parent=1 // pred_region
      %14 = vsyncadd [#allocation3], 0
      %s15 = sshll.u32 %s0, 4
      %s16 = int_to_ptr.hbm [resolvable:$true] %s15
      %s17 = sshll.u32 [#allocation2], 4
      %s18 = int_to_ptr.vmem [resolvable:$true] %s17
      %23 = dma.hbm_to_vmem [thread:$0]  %s16, 256, %s18, [#allocation3], 128, 128, 8
    $region5: #{tpu_custom_call.1} parent=1 // pred_fallthru
      _
    // Predicated region
    $region6: #{tpu_custom_call.1} parent=1 // pred_check
      _
    $region7: #{tpu_custom_call.1} parent=1 // pred_check_branch
      %25 = sbr.rel (0) target = $region9
    $region8: #{tpu_custom_call.1} parent=1 // pred_region
      %27 = vsyncadd [#allocation6], 0
      %s28 = sshll.u32 %s1, 4
      %s29 = int_to_ptr.hbm [resolvable:$true] %s28
      %s30 = sshll.u32 [#allocation5], 4
      %s31 = int_to_ptr.vmem [resolvable:$true] %s30
      %36 = dma.hbm_to_vmem [thread:$0]  %s29, 256, %s31, [#allocation6], 128, 128, 8
    $region9: #{tpu_custom_call.1} parent=1 // pred_fallthru
      _
    // Predicated region
    $region10: #{tpu_custom_call.1} parent=1 // pred_check
      _
    $region11: #{tpu_custom_call.1} parent=1 // pred_check_branch
      %38 = sbr.rel (0) target = $region13
    $region12: #{tpu_custom_call.1} parent=1 // pred_region
      %40 = vsyncadd [#allocation6], 0
      %s41 = sshll.u32 %s2, 4
      %s42 = int_to_ptr.hbm [resolvable:$true] %s41
      %s43 = sshll.u32 [#allocation7], 4
      %s44 = int_to_ptr.vmem [resolvable:$true] %s43
      %49 = dma.hbm_to_vmem [thread:$0]  %s42, 256, %s44, [#allocation6], 128, 128, 8
    $region13: #{tpu_custom_call.1} parent=1 // pred_fallthru
      _
    // Predicated region
    $region14: #{tpu_custom_call.1} parent=1 // pred_check
      _
    $region15: #{tpu_custom_call.1} parent=1 // pred_check_branch
      %51 = sbr.rel (0) target = $region17
    $region16: #{tpu_custom_call.1} parent=1 // pred_region
      %53 = dma.done [#allocation3], 256
    $region17: #{tpu_custom_call.1} parent=1 // pred_fallthru
      _
    // Predicated region
    $region18: #{tpu_custom_call.1} parent=1 // pred_check
      _
    $region19: #{tpu_custom_call.1} parent=1 // pred_check_branch
      %55 = sbr.rel (0) target = $region21
    $region20: #{tpu_custom_call.1} parent=1 // pred_region
      %57 = dma.done [#allocation6], 256
    $region21: #{tpu_custom_call.1} parent=1 // pred_fallthru
      _
    // Predicated region
    $region22: #{tpu_custom_call.1} parent=1 // pred_check
      _
    $region23: #{tpu_custom_call.1} parent=1 // pred_check_branch
      %59 = sbr.rel (0) target = $region25
    $region24: #{tpu_custom_call.1} parent=1 // pred_region
      %61 = dma.done [#allocation6], 256
    $region25: #{tpu_custom_call.1} parent=1 // pred_fallthru
      _
    %v62 = vld [vmem:[#allocation2] sm:$0xff]
    %v63 = vld [vmem:[#allocation2 + $0x8] sm:$0xff]
    %v64 = vld [vmem:[#allocation5] sm:$0xff]
    %v65 = vld [vmem:[#allocation5 + $0x8] sm:$0xff]
    %v66 = vld [vmem:[#allocation7] sm:$0xff]
    %v67 = vld [vmem:[#allocation7 + $0x8] sm:$0xff]
    %v68 = vsub.f32 %v62, %v64
    %v69 = vsub.f32 %v63, %v65
    %v70 = vand.u32 2147483647, %v66
    %v71 = vand.u32 2147483647, %v67
    %v72 = vsub.f32 0.0, %v66
    %v73 = vsub.f32 0.0, %v67
    %v74 = vmul.f32 %v72, %v68
    %v75 = vmul.f32 %v73, %v69
    %v76 = vmax.f32 %v74, 0.0
    %v77 = vmax.f32 %v75, 0.0
    %v78 = vand.u32 2147483647, %v74
    %v79 = vand.u32 2147483647, %v75
    %v80 = vsub.f32 0.0, %v78
    %v81 = vsub.f32 0.0, %v79
    %v82 = vmul.f32 %v80, 1.442695
    %v83 = vpow.pop %v82
    %v84 = vmul.f32 %v81, 1.442695
    %v85 = vpow.pop %v84
    %v86 = vadd.f32 %v83, 1.0
    %v87 = vlog2.pop %v86
    %v88 = vmul.f32 %v87, 0.6931472
    %v89 = vmul.f32 -0.5, %v83
    %v90 = vadd.f32 %v89, 1.0
    %v91 = vmul.f32 %v90, %v83
    %v92 = vand.u32 2147483647, %v83
    %vm93 = vcmp.lt.f32.partialorder %v92, 0.0004427343
    %v94 = vsel %vm93, %v91, %v88
    %v95 = vadd.f32 %v85, 1.0
    %v96 = vlog2.pop %v95
    %v97 = vmul.f32 %v96, 0.6931472
    %v98 = vmul.f32 -0.5, %v85
    %v99 = vadd.f32 %v98, 1.0
    %v100 = vmul.f32 %v99, %v85
    %v101 = vand.u32 2147483647, %v85
    %vm102 = vcmp.lt.f32.partialorder %v101, 0.0004427343
    %v103 = vsel %vm102, %v100, %v97
    %v104 = vadd.f32 %v76, %v94
    %v105 = vadd.f32 %v77, %v103
    %v106 = vmul.f32 %v70, %v104
    %v107 = vmul.f32 %v71, %v105
    %v108 = vsub.f32 1.0, %v70
    %v109 = vsub.f32 1.0, %v71
    %v110 = vmul.f32 %v108, %v68
    %v111 = vmul.f32 %v109, %v69
    %v112 = vmul.f32 %v110, %v68
    %v113 = vmul.f32 %v111, %v69
    %v114 = vadd.f32 %v106, %v112
    %v115 = vadd.f32 %v107, %v113
    %116 = vst [vmem:[#allocation8] sm:$0xff] %v114
    %117 = vst [vmem:[#allocation8 + $0x8] sm:$0xff] %v115
    // Predicated region
    $region26: #{tpu_custom_call.1} parent=1 // pred_check
      _
    $region27: #{tpu_custom_call.1} parent=1 // pred_check_branch
      %119 = sbr.rel (0) target = $region29
    $region28: #{tpu_custom_call.1} parent=1 // pred_region
      %121 = vsyncadd [#allocation4], 0
      %s122 = sshll.u32 [#allocation8], 4
      %s123 = int_to_ptr.vmem [resolvable:$true] %s122
      %s124 = sshll.u32 %s3, 4
      %s125 = int_to_ptr.hbm [resolvable:$true] %s124
      %130 = dma.vmem_to_hbm [thread:$0]  %s123, 256, %s125, [#allocation4], 128, 128, 8
    $region29: #{tpu_custom_call.1} parent=1 // pred_fallthru
      _
    // Predicated region
    $region30: #{tpu_custom_call.1} parent=1 // pred_check
      _
    $region31: #{tpu_custom_call.1} parent=1 // pred_check_branch
      %132 = sbr.rel (0) target = $region33
    $region32: #{tpu_custom_call.1} parent=1 // pred_region
      %134 = dma.done [#allocation4], 256
    $region33: #{tpu_custom_call.1} parent=1 // pred_fallthru
      _
    %135 = vsyncpa [#allocation3], 1
    %136 = vsyncpa [#allocation6], 1
    %137 = vsyncpa [#allocation4], 1

</llo_original>
